<compile_context>
chip_gen: v7x
topology: tpu7x:2x2x1
jax: 0.10.0
libtpu: 0.0.40
codegen_flags: <defaults>
</compile_context>

<pallas_src>
import jax
import jax.numpy as jnp
from jax.experimental import pallas as pl
from jax.experimental.pallas import tpu as pltpu

_LANE = 128      # vreg lane count (last-dim granularity)
_SUBLANE = 8     # f32 sublane count (second-to-last-dim granularity)


def _d_sigmoid_sq_kernel(x_ref, o_ref):
    # d_sigmoid(x) = sigmoid(x)*(1-sigmoid(x)) = 0.25*(1 - tanh(x/2)^2)
    # forward(x)   = d_sigmoid(x)**2
    x = x_ref[...].astype(jnp.float32)
    t = jnp.tanh(0.5 * x)                 # EUP transcendental
    d = 0.25 * (1.0 - t * t)              # VPU mul/sub only
    o_ref[...] = (d * d).astype(o_ref.dtype)


def _pick_layout(n):
    """Choose a lane-dense padded (rows, cols) layout and a row tile."""
    # Lane-dense width: use a big multiple of 128 when there is enough data,
    # otherwise a single 128-wide lane group.
    cols = 1024 if n >= 1024 * _SUBLANE else _LANE
    rows = -(-n // cols)                                  # ceil(n / cols)
    rows = ((rows + _SUBLANE - 1) // _SUBLANE) * _SUBLANE  # 8-row alignment (f32)
    # Row tile: up to 512 rows -> (512, 1024) f32 = 2 MiB/block.
    block_rows = min(512, rows)
    rows = ((rows + block_rows - 1) // block_rows) * block_rows  # even grid
    return rows, cols, block_rows


def native_call_model01(x):
    """Pallas equivalent of NativeCallModel01.forward: d_sigmoid(x)**2."""
    # NOTE: at the module's toy size ([B, 10]) the fixed pallas_call/DMA setup
    # cost dominates; this kernel is laid out to be efficient at real sizes.
    orig_shape = x.shape
    n = x.size
    rows, cols, block_rows = _pick_layout(n)

    flat = x.reshape(-1)
    padded = jnp.pad(flat, (0, rows * cols - n))
    x2d = padded.reshape(rows, cols)

    out2d = pl.pallas_call(
        _d_sigmoid_sq_kernel,
        out_shape=jax.ShapeDtypeStruct((rows, cols), x.dtype),
        grid=(rows // block_rows,),
        in_specs=[pl.BlockSpec((block_rows, cols), lambda i: (i, 0))],
        out_specs=pl.BlockSpec((block_rows, cols), lambda i: (i, 0)),
        compiler_params=pltpu.CompilerParams(
            dimension_semantics=("parallel",),   # shard grid across TCs on v7x
            vmem_limit_bytes=32 * 1024 * 1024,   # explicit; blocks use ~8 MiB
        ),
    )(x2d)

    return out2d.reshape(-1)[:n].reshape(orig_shape)


if __name__ == "__main__":
    key = jax.random.PRNGKey(0)
    # INPUT_DIM = (10,); batch of 2 -> x: [2, 10]
    x = jax.random.normal(key, (2, 10), dtype=jnp.float32)

    out = native_call_model01(x)
    out = jax.block_until_ready(out)

    # Reference check against plain-JAX math (sigmoid form).
    s = jax.nn.sigmoid(x)
    ref = (s * (1.0 - s)) ** 2
    assert out.shape == x.shape and out.dtype == x.dtype
    assert jnp.allclose(out, ref, atol=1e-6, rtol=1e-5)

    # Quick correctness check at a realistic (lane-dense, multi-tile) size too.
    xl = jax.random.normal(jax.random.PRNGKey(1), (1024, 1030), dtype=jnp.float32)
    outl = jax.block_until_ready(native_call_model01(xl))
    sl = jax.nn.sigmoid(xl)
    assert jnp.allclose(outl, (sl * (1.0 - sl)) ** 2, atol=1e-6, rtol=1e-5)

    print("KERNEL_OK")
</pallas_src>

<mosaic_0001>
module attributes {stable_mosaic.version = 11 : i64} {
  func.func @_d_sigmoid_sq_kernel(%arg0: i32, %arg1: memref<8x128xf32, #tpu.memory_space<vmem>>, %arg2: memref<8x128xf32, #tpu.memory_space<vmem>>) attributes {dimension_semantics = [#tpu.dimension_semantics<parallel>], iteration_bounds = array<i64: 1>, scalar_prefetch = 0 : i64, scratch_operands = 0 : i64, tpu.core_type = #tpu.core_type<tc>, window_params = [{transform_indices = @transform_0, window_bounds = array<i64: 8, 128>}, {transform_indices = @transform_1, window_bounds = array<i64: 8, 128>}]} {
    %c0 = arith.constant 0 : index
    %c0_0 = arith.constant 0 : index
    %0 = vector.load %arg1[%c0, %c0_0] : memref<8x128xf32, #tpu.memory_space<vmem>>, vector<8x128xf32>
    %cst = arith.constant 5.000000e-01 : f32
    %1 = vector.broadcast %cst : f32 to vector<8x128xf32>
    %2 = arith.mulf %1, %0 : vector<8x128xf32>
    %3 = math.tanh %2 : vector<8x128xf32>
    %4 = arith.mulf %3, %3 : vector<8x128xf32>
    %cst_1 = arith.constant 1.000000e+00 : f32
    %5 = vector.broadcast %cst_1 : f32 to vector<8x128xf32>
    %6 = arith.subf %5, %4 : vector<8x128xf32>
    %cst_2 = arith.constant 2.500000e-01 : f32
    %7 = vector.broadcast %cst_2 : f32 to vector<8x128xf32>
    %8 = arith.mulf %7, %6 : vector<8x128xf32>
    %9 = arith.mulf %8, %8 : vector<8x128xf32>
    %c0_3 = arith.constant 0 : index
    %c0_4 = arith.constant 0 : index
    %10 = vector.load %arg2[%c0_3, %c0_4] : memref<8x128xf32, #tpu.memory_space<vmem>>, vector<8x128xf32>
    tpu.vector_store %arg2[%c0_3, %c0_4], %9 {strides = array<i32>} : memref<8x128xf32, #tpu.memory_space<vmem>>, vector<8x128xf32>,
    return
  }
  func.func @transform_0(%arg0: i32) -> (i32, i32) {
    %c0_i32 = arith.constant 0 : i32
    %c0_i32_0 = arith.constant 0 : i32
    return %arg0, %c0_i32 : i32, i32
  }
  func.func @transform_1(%arg0: i32) -> (i32, i32) {
    %c0_i32 = arith.constant 0 : i32
    %c0_i32_0 = arith.constant 0 : i32
    return %arg0, %c0_i32 : i32, i32
  }
}

</mosaic_0001>

<llo_original>
// kernel: tpu_custom_call.1
$region0: #{tpu_custom_call.1}
  #allocation0 [shape = 'u32[]', space=smem, size = 0x4, offset = 0x4, fixed_abs, tag = 'smem constant byte address 0x4 - core index']
  #allocation1 [shape = 'u32[144,128]{1,0:T(1,128)}', space=vmem, size = 0x12000, scoped, tag = 'internal scratch']
  %s0 = inlined_call_operand.hbm [shape: f32[8,128], index: 0, kind: input, shape index: {}]
  %s1 = inlined_call_operand.hbm [shape: f32[8,128], index: 1, kind: output, shape index: {}]
  %s2 = sld [smem:[#allocation0]]
  $region18: #{tpu_custom_call.1} parent=0
    _
  %s4 = ssub.s32 1, %s2
  %s5 = scalar_select 0, %s4, %s2
  $region1: #{tpu_custom_call.1} parent=0
    #allocation2 [shape = 'u8[4096]{0}', space=vmem, size = 0x1000, scoped, tag = 'input window, operand 0, single buffered']
    #allocation3 [shape = 's32[1]{0}', space=sflag, size = 0x4, scoped, tag = 'scoped memory for tpu_custom_call.1']
    #allocation4 [shape = 's32[1]{0}', space=sflag, size = 0x4, scoped, tag = 'scoped memory for tpu_custom_call.1']
    #allocation5 [shape = 'u8[4096]{0}', space=vmem, size = 0x1000, scoped, tag = 'output window, operand 0, single buffered']
    %6 = vsyncpa [#allocation3], 0
    %7 = vsyncpa [#allocation4], 0
    // Predicated region
    $region2: #{tpu_custom_call.1} parent=1 // pred_check
      _
    $region3: #{tpu_custom_call.1} parent=1 // pred_check_branch
      %9 = sbr.rel (0) target = $region5
    $region4: #{tpu_custom_call.1} parent=1 // pred_region
      %s11 = ssub.s32 128, 128
      %12 = vsyncadd [#allocation3], %s11
      %s14 = sshll.u32 [#allocation2], 4
      %s15 = int_to_ptr.vmem [resolvable:$true] %s14
      %17 = dma.hbm_to_vmem [thread:$0]  %s0, 128, %s15, [#allocation3]
    $region5: #{tpu_custom_call.1} parent=1 // pred_fallthru
      _
    // Predicated region
    $region6: #{tpu_custom_call.1} parent=1 // pred_check
      _
    $region7: #{tpu_custom_call.1} parent=1 // pred_check_branch
      %19 = sbr.rel (0) target = $region9
    $region8: #{tpu_custom_call.1} parent=1 // pred_region
      %20 = dma.done [#allocation3], 128
    $region9: #{tpu_custom_call.1} parent=1 // pred_fallthru
      _
    %v21 = vld [vmem:[#allocation2] sm:$0xff]
    %v22 = vmul.f32 %v21, 0.5
    %v23 = vtanh.pop %v22
    %v24 = vmul.f32 %v23, %v23
    %v25 = vsub.f32 1.0, %v24
    %v26 = vmul.f32 %v25, 0.25
    %v27 = vmul.f32 %v26, %v26
    %28 = vst [vmem:[#allocation5] sm:$0xff] %v27
    // Predicated region
    $region10: #{tpu_custom_call.1} parent=1 // pred_check
      _
    $region11: #{tpu_custom_call.1} parent=1 // pred_check_branch
      %30 = sbr.rel (0) target = $region13
    $region12: #{tpu_custom_call.1} parent=1 // pred_region
      %s32 = ssub.s32 128, 128
      %33 = vsyncadd [#allocation4], %s32
      %s35 = sshll.u32 [#allocation5], 4
      %s36 = int_to_ptr.vmem [resolvable:$true] %s35
      %38 = dma.vmem_to_hbm [thread:$0]  %s36, 128, %s1, [#allocation4]
    $region13: #{tpu_custom_call.1} parent=1 // pred_fallthru
      _
    // Predicated region
    $region14: #{tpu_custom_call.1} parent=1 // pred_check
      _
    $region15: #{tpu_custom_call.1} parent=1 // pred_check_branch
      %40 = sbr.rel (0) target = $region17
    $region16: #{tpu_custom_call.1} parent=1 // pred_region
      %41 = dma.done [#allocation4], 128
    $region17: #{tpu_custom_call.1} parent=1 // pred_fallthru
      _
    %42 = vsyncpa [#allocation3], 1
    %43 = vsyncpa [#allocation4], 1

</llo_original>
